<compile_context>
chip_gen: v6e
topology: v6e:2x2x1
jax: 0.10.0
libtpu: 0.0.40
codegen_flags: <defaults>
</compile_context>

<pallas_src>
import jax
import jax.numpy as jnp
from jax.experimental import pallas as pl
from jax.experimental.pallas import tpu as pltpu


def _round_up(n, m):
    return ((n + m - 1) // m) * m


def _categorical_policy_kernel(xT_ref, w1_ref, b1_ref, w2_ref, b2_ref,
                               w3_ref, b3_ref, aT_ref, gT_ref,
                               pi_ref, logp_ref, logp_pi_ref):
    xT = xT_ref[...]                                              # (D_in, TB)

    # --- MLP: tanh hidden layers, linear output (MLP.forward), all f32 ---
    h1 = jnp.tanh(jnp.dot(w1_ref[...], xT,
                          preferred_element_type=jnp.float32) + b1_ref[...])
    h2 = jnp.tanh(jnp.dot(w2_ref[...], h1,
                          preferred_element_type=jnp.float32) + b2_ref[...])
    logits = (jnp.dot(w3_ref[...], h2,
                      preferred_element_type=jnp.float32) + b3_ref[...])  # (A, TB)

    # --- log-softmax over the action (sublane) axis ---
    m = jnp.max(logits, axis=0, keepdims=True)                    # (1, TB)
    z = logits - m                                                # (A, TB)
    lse = jnp.log(jnp.sum(jnp.exp(z), axis=0, keepdims=True))     # (1, TB)
    log_probs = z - lse                                           # (A, TB)

    # --- Categorical sample via Gumbel-max (noise precomputed in wrapper,
    #     so no in-kernel logs for the sample and no per-tile seed reuse) ---
    scores = z + gT_ref[...]                                      # (A, TB)
    act = jax.lax.broadcasted_iota(jnp.int32, scores.shape, 0)    # (A, TB)
    smax = jnp.max(scores, axis=0, keepdims=True)                 # (1, TB)
    big = jnp.int32(1 << 30)
    pi = jnp.min(jnp.where(scores >= smax, act, big),
                 axis=0, keepdims=True)                           # (1, TB) int32
    pi_ref[...] = pi

    # --- gather log-probs with one-hot masks (no dynamic gather on TPU) ---
    onehot_pi = (act == pi).astype(jnp.float32)
    logp_pi_ref[...] = jnp.sum(log_probs * onehot_pi, axis=0, keepdims=True)

    onehot_a = (act == aT_ref[...]).astype(jnp.float32)
    logp_ref[...] = jnp.sum(log_probs * onehot_a, axis=0, keepdims=True)


def categorical_policy_forward(params, x, a, key, *, block_batch=512):
    """CategoricalPolicy forward in one Pallas kernel.

    params: [(w, b), ...] with w (out, in) [torch nn.Linear layout], b (out, 1).
    x: (B, D_in) float32, a: (B,) int, key: jax PRNG key used for the sample.
    Returns (pi, logp, logp_pi), each of shape (B,).
    """
    (w1, b1), (w2, b2), (w3, b3) = params
    B, d_in = x.shape
    A = w3.shape[0]

    # Batch tile: 512 lanes (multiple of 128) when tiled, else the 8-padded batch.
    TB = min(block_batch, _round_up(B, 8))
    B_pad = _round_up(B, TB)
    num_tiles = B_pad // TB

    xT = jnp.pad(x.astype(jnp.float32).T, ((0, 0), (0, B_pad - B)))
    aT = jnp.pad(a.astype(jnp.int32).reshape(1, B), ((0, 0), (0, B_pad - B)))
    gT = jax.random.gumbel(key, (A, B_pad), jnp.float32)

    resident = lambda shp: pl.BlockSpec(shp, lambda i: tuple(0 for _ in shp))
    batch_tile = lambda rows: pl.BlockSpec((rows, TB), lambda i: (0, i))

    grid_spec = pltpu.PrefetchScalarGridSpec(
        num_scalar_prefetch=0,
        grid=(num_tiles,),
        in_specs=[batch_tile(d_in),                     # x^T        (D_in, TB)
                  resident(w1.shape), resident(b1.shape),
                  resident(w2.shape), resident(b2.shape),
                  resident(w3.shape), resident(b3.shape),
                  batch_tile(1),                        # actions    (1, TB)
                  batch_tile(A)],                       # gumbel     (A, TB)
        out_specs=[batch_tile(1), batch_tile(1), batch_tile(1)],
    )

    out_shape = (jax.ShapeDtypeStruct((1, B_pad), jnp.int32),
                 jax.ShapeDtypeStruct((1, B_pad), jnp.float32),
                 jax.ShapeDtypeStruct((1, B_pad), jnp.float32))

    h1_dim, h2_dim = w1.shape[0], w2.shape[0]
    flops = 2 * B_pad * (d_in * h1_dim + h1_dim * h2_dim + h2_dim * A)
    transcendentals = B_pad * (h1_dim + h2_dim + A + 1)   # tanh, exp, log
    bytes_accessed = 4 * (int(xT.size) + int(aT.size) + int(gT.size) + 3 * B_pad
                          + sum(int(t.size) for p in params for t in p))

    pi2d, logp2d, logp_pi2d = pl.pallas_call(
        _categorical_policy_kernel,
        out_shape=out_shape,
        grid_spec=grid_spec,
        compiler_params=pltpu.CompilerParams(
            dimension_semantics=("parallel",)),
        cost_estimate=pl.CostEstimate(flops=flops,
                                      transcendentals=transcendentals,
                                      bytes_accessed=bytes_accessed),
    )(xT, w1, b1, w2, b2, w3, b3, aT, gT)

    return pi2d[0, :B], logp2d[0, :B], logp_pi2d[0, :B]


def init_params(key, input_dim, hidden_dims, action_dim):
    """Deterministic init; weights (out, in) torch layout, biases zero (out, 1)."""
    dims = [input_dim] + list(hidden_dims) + [action_dim]
    params = []
    for i in range(len(dims) - 1):
        key, sub = jax.random.split(key)
        fan_in = dims[i]
        w = (jax.random.normal(sub, (dims[i + 1], dims[i]), jnp.float32)
             / jnp.sqrt(jnp.float32(fan_in)))
        b = jnp.zeros((dims[i + 1], 1), jnp.float32)
        params.append((w, b))
    return params


def _reference_log_probs(params, x):
    """Pure-JAX reference for the deterministic part (normalized log-probs)."""
    h = x
    for w, b in params[:-1]:
        h = jnp.tanh(h @ w.T + b[:, 0])
    w, b = params[-1]
    logits = h @ w.T + b[:, 0]
    return jax.nn.log_softmax(logits, axis=-1)


if __name__ == "__main__":
    B, input_dim, hidden_dims, action_dim = 8, 16, (32, 32), 8

    key = jax.random.PRNGKey(0)
    k_params, k_x, k_a, k_sample = jax.random.split(key, 4)

    params = init_params(k_params, input_dim, hidden_dims, action_dim)
    x = jax.random.normal(k_x, (B, input_dim), jnp.float32)
    a = jax.random.randint(k_a, (B,), 0, action_dim, jnp.int32)

    pi, logp, logp_pi = categorical_policy_forward(params, x, a, k_sample)
    jax.block_until_ready((pi, logp, logp_pi))

    # sanity: shapes, action range, finite / non-positive log-probs
    assert pi.shape == (B,) and logp.shape == (B,) and logp_pi.shape == (B,)
    assert bool(jnp.all((pi >= 0) & (pi < action_dim)))
    assert bool(jnp.all(jnp.isfinite(logp))) and bool(jnp.all(logp <= 1e-5))
    assert bool(jnp.all(jnp.isfinite(logp_pi))) and bool(jnp.all(logp_pi <= 1e-5))

    # deterministic parts vs pure-JAX reference
    ref_lp = _reference_log_probs(params, x)
    ref_logp = ref_lp[jnp.arange(B), a]
    ref_logp_pi = ref_lp[jnp.arange(B), pi]
    assert bool(jnp.allclose(logp, ref_logp, rtol=2e-2, atol=2e-2))
    assert bool(jnp.allclose(logp_pi, ref_logp_pi, rtol=2e-2, atol=2e-2))

    print("KERNEL_OK")
</pallas_src>

<mosaic_0001>
module attributes {stable_mosaic.version = 11 : i64} {
  func.func @_categorical_policy_kernel(%arg0: i32, %arg1: memref<16x8xf32, #tpu.memory_space<vmem>>, %arg2: memref<32x16xf32, #tpu.memory_space<vmem>>, %arg3: memref<32x1xf32, #tpu.memory_space<vmem>>, %arg4: memref<32x32xf32, #tpu.memory_space<vmem>>, %arg5: memref<32x1xf32, #tpu.memory_space<vmem>>, %arg6: memref<8x32xf32, #tpu.memory_space<vmem>>, %arg7: memref<8x1xf32, #tpu.memory_space<vmem>>, %arg8: memref<1x8xi32, #tpu.memory_space<vmem>>, %arg9: memref<8x8xf32, #tpu.memory_space<vmem>>, %arg10: memref<1x8xi32, #tpu.memory_space<vmem>>, %arg11: memref<1x8xf32, #tpu.memory_space<vmem>>, %arg12: memref<1x8xf32, #tpu.memory_space<vmem>>) attributes {dimension_semantics = [#tpu.dimension_semantics<parallel>], iteration_bounds = array<i64: 1>, scalar_prefetch = 0 : i64, scratch_operands = 0 : i64, tpu.core_type = #tpu.core_type<tc>, window_params = [{transform_indices = @transform_0, window_bounds = array<i64: 16, 8>}, {pipeline_mode = #tpu.pipeline_mode<synchronous>, transform_indices = @transform_1, window_bounds = array<i64: 32, 16>}, {pipeline_mode = #tpu.pipeline_mode<synchronous>, transform_indices = @transform_2, window_bounds = array<i64: 32, 1>}, {pipeline_mode = #tpu.pipeline_mode<synchronous>, transform_indices = @transform_3, window_bounds = array<i64: 32, 32>}, {pipeline_mode = #tpu.pipeline_mode<synchronous>, transform_indices = @transform_4, window_bounds = array<i64: 32, 1>}, {pipeline_mode = #tpu.pipeline_mode<synchronous>, transform_indices = @transform_5, window_bounds = array<i64: 8, 32>}, {pipeline_mode = #tpu.pipeline_mode<synchronous>, transform_indices = @transform_6, window_bounds = array<i64: 8, 1>}, {transform_indices = @transform_7, window_bounds = array<i64: 1, 8>}, {transform_indices = @transform_8, window_bounds = array<i64: 8, 8>}, {transform_indices = @transform_9, window_bounds = array<i64: 1, 8>}, {transform_indices = @transform_10, window_bounds = array<i64: 1, 8>}, {transform_indices = @transform_11, window_bounds = array<i64: 1, 8>}]} {
    %c0 = arith.constant 0 : index
    %c0_0 = arith.constant 0 : index
    %0 = vector.load %arg1[%c0, %c0_0] : memref<16x8xf32, #tpu.memory_space<vmem>>, vector<16x8xf32>
    %c0_1 = arith.constant 0 : index
    %c0_2 = arith.constant 0 : index
    %1 = vector.load %arg2[%c0_1, %c0_2] : memref<32x16xf32, #tpu.memory_space<vmem>>, vector<32x16xf32>
    %cst = arith.constant dense<0.000000e+00> : vector<32x8xf32>
    %2 = tpu.matmul %1, %0, %cst {dimension_numbers = #tpu.dot_dimension_numbers<[1], [0], [0], [1], [0, 0, 1, 1], [], []>} : vector<32x16xf32>, vector<16x8xf32>, vector<32x8xf32> -> vector<32x8xf32>
    %c0_3 = arith.constant 0 : index
    %c0_4 = arith.constant 0 : index
    %3 = vector.load %arg3[%c0_3, %c0_4] : memref<32x1xf32, #tpu.memory_space<vmem>>, vector<32x1xf32>
    %4 = vector.broadcast %3 : vector<32x1xf32> to vector<32x8xf32>
    %5 = arith.addf %2, %4 : vector<32x8xf32>
    %6 = math.tanh %5 : vector<32x8xf32>
    %c0_5 = arith.constant 0 : index
    %c0_6 = arith.constant 0 : index
    %7 = vector.load %arg4[%c0_5, %c0_6] : memref<32x32xf32, #tpu.memory_space<vmem>>, vector<32x32xf32>
    %cst_7 = arith.constant dense<0.000000e+00> : vector<32x8xf32>
    %8 = tpu.matmul %7, %6, %cst_7 {dimension_numbers = #tpu.dot_dimension_numbers<[1], [0], [0], [1], [0, 0, 1, 1], [], []>} : vector<32x32xf32>, vector<32x8xf32>, vector<32x8xf32> -> vector<32x8xf32>
    %c0_8 = arith.constant 0 : index
    %c0_9 = arith.constant 0 : index
    %9 = vector.load %arg5[%c0_8, %c0_9] : memref<32x1xf32, #tpu.memory_space<vmem>>, vector<32x1xf32>
    %10 = vector.broadcast %9 : vector<32x1xf32> to vector<32x8xf32>
    %11 = arith.addf %8, %10 : vector<32x8xf32>
    %12 = math.tanh %11 : vector<32x8xf32>
    %c0_10 = arith.constant 0 : index
    %c0_11 = arith.constant 0 : index
    %13 = vector.load %arg6[%c0_10, %c0_11] : memref<8x32xf32, #tpu.memory_space<vmem>>, vector<8x32xf32>
    %cst_12 = arith.constant dense<0.000000e+00> : vector<8x8xf32>
    %14 = tpu.matmul %13, %12, %cst_12 {dimension_numbers = #tpu.dot_dimension_numbers<[1], [0], [0], [1], [0, 0, 1, 1], [], []>} : vector<8x32xf32>, vector<32x8xf32>, vector<8x8xf32> -> vector<8x8xf32>
    %c0_13 = arith.constant 0 : index
    %c0_14 = arith.constant 0 : index
    %15 = vector.load %arg7[%c0_13, %c0_14] : memref<8x1xf32, #tpu.memory_space<vmem>>, vector<8x1xf32>
    %16 = vector.broadcast %15 : vector<8x1xf32> to vector<8x8xf32>
    %17 = arith.addf %14, %16 : vector<8x8xf32>
    %cst_15 = arith.constant dense<0xFF800000> : vector<8xf32>
    %18 = vector.multi_reduction <maximumf>, %17, %cst_15 [0] : vector<8x8xf32> to vector<8xf32>
    %19 = vector.shape_cast %18 : vector<8xf32> to vector<1x8xf32>
    %20 = vector.broadcast %19 : vector<1x8xf32> to vector<8x8xf32>
    %21 = arith.subf %17, %20 : vector<8x8xf32>
    %22 = math.exp %21 : vector<8x8xf32>
    %cst_16 = arith.constant dense<0.000000e+00> : vector<8xf32>
    %23 = vector.multi_reduction <add>, %22, %cst_16 [0] : vector<8x8xf32> to vector<8xf32>
    %24 = vector.shape_cast %23 : vector<8xf32> to vector<1x8xf32>
    %25 = math.log %24 : vector<1x8xf32>
    %26 = vector.broadcast %25 : vector<1x8xf32> to vector<8x8xf32>
    %27 = arith.subf %21, %26 : vector<8x8xf32>
    %c0_17 = arith.constant 0 : index
    %c0_18 = arith.constant 0 : index
    %28 = vector.load %arg9[%c0_17, %c0_18] : memref<8x8xf32, #tpu.memory_space<vmem>>, vector<8x8xf32>
    %29 = arith.addf %21, %28 : vector<8x8xf32>
    %30 = tpu.iota {dimensions = array<i32: 0>} : vector<8x8xi32>
    %cst_19 = arith.constant dense<0xFF800000> : vector<8xf32>
    %31 = vector.multi_reduction <maximumf>, %29, %cst_19 [0] : vector<8x8xf32> to vector<8xf32>
    %32 = vector.shape_cast %31 : vector<8xf32> to vector<1x8xf32>
    %33 = vector.broadcast %32 : vector<1x8xf32> to vector<8x8xf32>
    %34 = arith.cmpf oge, %29, %33 : vector<8x8xf32>
    %c1073741824_i32 = arith.constant 1073741824 : i32
    %35 = vector.broadcast %c1073741824_i32 : i32 to vector<8x8xi32>
    %36 = arith.select %34, %30, %35 : vector<8x8xi1>, vector<8x8xi32>
    %cst_20 = arith.constant dense<2147483647> : vector<8xi32>
    %37 = vector.multi_reduction <minsi>, %36, %cst_20 [0] : vector<8x8xi32> to vector<8xi32>
    %38 = vector.shape_cast %37 : vector<8xi32> to vector<1x8xi32>
    %c0_21 = arith.constant 0 : index
    %c0_22 = arith.constant 0 : index
    %39 = vector.load %arg10[%c0_21, %c0_22] : memref<1x8xi32, #tpu.memory_space<vmem>>, vector<1x8xi32>
    tpu.vector_store %arg10[%c0_21, %c0_22], %38 {strides = array<i32>} : memref<1x8xi32, #tpu.memory_space<vmem>>, vector<1x8xi32>,
    %40 = vector.broadcast %38 : vector<1x8xi32> to vector<8x8xi32>
    %41 = arith.cmpi eq, %30, %40 : vector<8x8xi32>
    %42 = arith.extui %41 : vector<8x8xi1> to vector<8x8xi32>
    %43 = arith.sitofp %42 : vector<8x8xi32> to vector<8x8xf32>
    %44 = arith.mulf %27, %43 : vector<8x8xf32>
    %cst_23 = arith.constant dense<0.000000e+00> : vector<8xf32>
    %45 = vector.multi_reduction <add>, %44, %cst_23 [0] : vector<8x8xf32> to vector<8xf32>
    %46 = vector.shape_cast %45 : vector<8xf32> to vector<1x8xf32>
    %c0_24 = arith.constant 0 : index
    %c0_25 = arith.constant 0 : index
    %47 = vector.load %arg12[%c0_24, %c0_25] : memref<1x8xf32, #tpu.memory_space<vmem>>, vector<1x8xf32>
    tpu.vector_store %arg12[%c0_24, %c0_25], %46 {strides = array<i32>} : memref<1x8xf32, #tpu.memory_space<vmem>>, vector<1x8xf32>,
    %c0_26 = arith.constant 0 : index
    %c0_27 = arith.constant 0 : index
    %48 = vector.load %arg8[%c0_26, %c0_27] : memref<1x8xi32, #tpu.memory_space<vmem>>, vector<1x8xi32>
    %49 = vector.broadcast %48 : vector<1x8xi32> to vector<8x8xi32>
    %50 = arith.cmpi eq, %30, %49 : vector<8x8xi32>
    %51 = arith.extui %50 : vector<8x8xi1> to vector<8x8xi32>
    %52 = arith.sitofp %51 : vector<8x8xi32> to vector<8x8xf32>
    %53 = arith.mulf %27, %52 : vector<8x8xf32>
    %cst_28 = arith.constant dense<0.000000e+00> : vector<8xf32>
    %54 = vector.multi_reduction <add>, %53, %cst_28 [0] : vector<8x8xf32> to vector<8xf32>
    %55 = vector.shape_cast %54 : vector<8xf32> to vector<1x8xf32>
    %c0_29 = arith.constant 0 : index
    %c0_30 = arith.constant 0 : index
    %56 = vector.load %arg11[%c0_29, %c0_30] : memref<1x8xf32, #tpu.memory_space<vmem>>, vector<1x8xf32>
    tpu.vector_store %arg11[%c0_29, %c0_30], %55 {strides = array<i32>} : memref<1x8xf32, #tpu.memory_space<vmem>>, vector<1x8xf32>,
    return
  }
  func.func @transform_0(%arg0: i32) -> (i32, i32) {
    %c0_i32 = arith.constant 0 : i32
    %c0_i32_0 = arith.constant 0 : i32
    return %c0_i32, %arg0 : i32, i32
  }
  func.func @transform_1(%arg0: i32) -> (i32, i32) {
    %c0_i32 = arith.constant 0 : i32
    %c0_i32_0 = arith.constant 0 : i32
    %c0_i32_1 = arith.constant 0 : i32
    return %c0_i32, %c0_i32_0 : i32, i32
  }
  func.func @transform_2(%arg0: i32) -> (i32, i32) {
    %c0_i32 = arith.constant 0 : i32
    %c0_i32_0 = arith.constant 0 : i32
    %c0_i32_1 = arith.constant 0 : i32
    return %c0_i32, %c0_i32_0 : i32, i32
  }
  func.func @transform_3(%arg0: i32) -> (i32, i32) {
    %c0_i32 = arith.constant 0 : i32
    %c0_i32_0 = arith.constant 0 : i32
    %c0_i32_1 = arith.constant 0 : i32
    return %c0_i32, %c0_i32_0 : i32, i32
  }
  func.func @transform_4(%arg0: i32) -> (i32, i32) {
    %c0_i32 = arith.constant 0 : i32
    %c0_i32_0 = arith.constant 0 : i32
    %c0_i32_1 = arith.constant 0 : i32
    return %c0_i32, %c0_i32_0 : i32, i32
  }
  func.func @transform_5(%arg0: i32) -> (i32, i32) {
    %c0_i32 = arith.constant 0 : i32
    %c0_i32_0 = arith.constant 0 : i32
    %c0_i32_1 = arith.constant 0 : i32
    return %c0_i32, %c0_i32_0 : i32, i32
  }
  func.func @transform_6(%arg0: i32) -> (i32, i32) {
    %c0_i32 = arith.constant 0 : i32
    %c0_i32_0 = arith.constant 0 : i32
    %c0_i32_1 = arith.constant 0 : i32
    return %c0_i32, %c0_i32_0 : i32, i32
  }
  func.func @transform_7(%arg0: i32) -> (i32, i32) {
    %c0_i32 = arith.constant 0 : i32
    %c0_i32_0 = arith.constant 0 : i32
    return %c0_i32, %arg0 : i32, i32
  }
  func.func @transform_8(%arg0: i32) -> (i32, i32) {
    %c0_i32 = arith.constant 0 : i32
    %c0_i32_0 = arith.constant 0 : i32
    return %c0_i32, %arg0 : i32, i32
  }
  func.func @transform_9(%arg0: i32) -> (i32, i32) {
    %c0_i32 = arith.constant 0 : i32
    %c0_i32_0 = arith.constant 0 : i32
    return %c0_i32, %arg0 : i32, i32
  }
  func.func @transform_10(%arg0: i32) -> (i32, i32) {
    %c0_i32 = arith.constant 0 : i32
    %c0_i32_0 = arith.constant 0 : i32
    return %c0_i32, %arg0 : i32, i32
  }
  func.func @transform_11(%arg0: i32) -> (i32, i32) {
    %c0_i32 = arith.constant 0 : i32
    %c0_i32_0 = arith.constant 0 : i32
    return %c0_i32, %arg0 : i32, i32
  }
}

</mosaic_0001>

<llo_original>
// kernel: tpu_custom_call.1
$region0: #{tpu_custom_call.1}
  #allocation0 [shape = 'u32[]', space=smem, size = 0x4, offset = 0x4, fixed_abs, tag = 'smem constant byte address 0x4 - core index']
  #allocation1 [shape = 'u32[144,128]{1,0:T(1,128)}', space=vmem, size = 0x12000, scoped, tag = 'internal scratch']
  %s0 = inlined_call_operand.vmem [shape: f32[16,8], index: 0, kind: input, shape index: {}]
  %s1 = inlined_call_operand.vmem [shape: f32[32,16], index: 1, kind: input, shape index: {}]
  %s2 = inlined_call_operand.vmem [shape: f32[32,1], index: 2, kind: input, shape index: {}]
  %s3 = inlined_call_operand.vmem [shape: f32[32,32], index: 3, kind: input, shape index: {}]
  %s4 = inlined_call_operand.vmem [shape: f32[32,1], index: 4, kind: input, shape index: {}]
  %s5 = inlined_call_operand.vmem [shape: f32[8,32], index: 5, kind: input, shape index: {}]
  %s6 = inlined_call_operand.vmem [shape: f32[8,1], index: 6, kind: input, shape index: {}]
  %s7 = inlined_call_operand.vmem [shape: s32[1,8], index: 7, kind: input, shape index: {}]
  %s8 = inlined_call_operand.vmem [shape: f32[8,8], index: 8, kind: input, shape index: {}]
  %s9 = inlined_call_operand.hbm [shape: s32[1,8], index: 9, kind: output, shape index: {0}]
  %s10 = inlined_call_operand.hbm [shape: f32[1,8], index: 10, kind: output, shape index: {1}]
  %s11 = inlined_call_operand.hbm [shape: f32[1,8], index: 11, kind: output, shape index: {2}]
  %12 = xla_tuple %s9, %s10, %s11
  %s13 = sld [smem:[#allocation0]]
  $region62: #{tpu_custom_call.1} parent=0
    _
  %s15 = ssub.s32 1, %s13
  %s16 = scalar_select 0, %s15, %s13
  $region1: #{tpu_custom_call.1} parent=0
    #allocation2 [shape = 'u8[512]{0}', space=vmem, size = 0x400, scoped, tag = 'output window, operand 0, single buffered']
    #allocation3 [shape = 's32[1]{0}', space=sflag, size = 0x4, scoped, tag = 'scoped memory for tpu_custom_call.1']
    #allocation4 [shape = 'u8[512]{0}', space=vmem, size = 0x400, scoped, tag = 'output window, operand 1, single buffered']
    #allocation5 [shape = 's32[1]{0}', space=sflag, size = 0x4, scoped, tag = 'scoped memory for tpu_custom_call.1']
    #allocation6 [shape = 'u8[512]{0}', space=vmem, size = 0x400, scoped, tag = 'output window, operand 2, single buffered']
    %17 = vsyncpa [#allocation3], 0
    %18 = vsyncpa [#allocation5], 0
    // Predicated region
    $region2: #{tpu_custom_call.1} parent=1 // pred_check
      _
    $region3: #{tpu_custom_call.1} parent=1 // pred_check_branch
      %20 = sbr.rel (0) target = $region5
    $region4: #{tpu_custom_call.1} parent=1 // pred_region
      _
    $region5: #{tpu_custom_call.1} parent=1 // pred_fallthru
      _
    // Predicated region
    $region6: #{tpu_custom_call.1} parent=1 // pred_check
      _
    $region7: #{tpu_custom_call.1} parent=1 // pred_check_branch
      %22 = sbr.rel (0) target = $region9
    $region8: #{tpu_custom_call.1} parent=1 // pred_region
      _
    $region9: #{tpu_custom_call.1} parent=1 // pred_fallthru
      _
    // Predicated region
    $region10: #{tpu_custom_call.1} parent=1 // pred_check
      _
    $region11: #{tpu_custom_call.1} parent=1 // pred_check_branch
      %24 = sbr.rel (0) target = $region13
    $region12: #{tpu_custom_call.1} parent=1 // pred_region
      _
    $region13: #{tpu_custom_call.1} parent=1 // pred_fallthru
      _
    // Predicated region
    $region14: #{tpu_custom_call.1} parent=1 // pred_check
      _
    $region15: #{tpu_custom_call.1} parent=1 // pred_check_branch
      %26 = sbr.rel (0) target = $region17
    $region16: #{tpu_custom_call.1} parent=1 // pred_region
      _
    $region17: #{tpu_custom_call.1} parent=1 // pred_fallthru
      _
    // Predicated region
    $region18: #{tpu_custom_call.1} parent=1 // pred_check
      _
    $region19: #{tpu_custom_call.1} parent=1 // pred_check_branch
      %28 = sbr.rel (0) target = $region21
    $region20: #{tpu_custom_call.1} parent=1 // pred_region
      _
    $region21: #{tpu_custom_call.1} parent=1 // pred_fallthru
      _
    // Predicated region
    $region22: #{tpu_custom_call.1} parent=1 // pred_check
      _
    $region23: #{tpu_custom_call.1} parent=1 // pred_check_branch
      %30 = sbr.rel (0) target = $region25
    $region24: #{tpu_custom_call.1} parent=1 // pred_region
      _
    $region25: #{tpu_custom_call.1} parent=1 // pred_fallthru
      _
    // Predicated region
    $region26: #{tpu_custom_call.1} parent=1 // pred_check
      _
    $region27: #{tpu_custom_call.1} parent=1 // pred_check_branch
      %32 = sbr.rel (0) target = $region29
    $region28: #{tpu_custom_call.1} parent=1 // pred_region
      _
    $region29: #{tpu_custom_call.1} parent=1 // pred_fallthru
      _
    // Predicated region
    $region30: #{tpu_custom_call.1} parent=1 // pred_check
      _
    $region31: #{tpu_custom_call.1} parent=1 // pred_check_branch
      %34 = sbr.rel (0) target = $region33
    $region32: #{tpu_custom_call.1} parent=1 // pred_region
      _
    $region33: #{tpu_custom_call.1} parent=1 // pred_fallthru
      _
    // Predicated region
    $region34: #{tpu_custom_call.1} parent=1 // pred_check
      _
    $region35: #{tpu_custom_call.1} parent=1 // pred_check_branch
      %36 = sbr.rel (0) target = $region37
    $region36: #{tpu_custom_call.1} parent=1 // pred_region
      _
    $region37: #{tpu_custom_call.1} parent=1 // pred_fallthru
      _
    %v37 = vld [vmem:[%s0] sm:$0xff]
    %v38 = vld [vmem:[%s0 + $0x8] sm:$0xff]
    %v39 = vld [vmem:[%s1] sm:$0xff]
    %v40 = vld [vmem:[%s1 + $0x8] sm:$0xff]
    %v41 = vld [vmem:[%s1 + $0x10] sm:$0xff]
    %v42 = vld [vmem:[%s1 + $0x18] sm:$0xff]
    %v43 = vld [vmem:[%s2] sm:$0xff]
    %v44 = vld [vmem:[%s2 + $0x8] sm:$0xff]
    %v45 = vld [vmem:[%s2 + $0x10] sm:$0xff]
    %v46 = vld [vmem:[%s2 + $0x18] sm:$0xff]
    %48 = vset.pattern.permute.xlu0 0
    %49 = vperm.xlu0 %48, %v43
    %v50 = vpop.permute.xlu0 %49
    %53 = vset.pattern.permute.xlu0 0
    %54 = vperm.xlu0 %53, %v44
    %v55 = vpop.permute.xlu0 %54
    %58 = vset.pattern.permute.xlu0 0
    %59 = vperm.xlu0 %58, %v45
    %v60 = vpop.permute.xlu0 %59
    %63 = vset.pattern.permute.xlu0 0
    %64 = vperm.xlu0 %63, %v46
    %v65 = vpop.permute.xlu0 %64
    %vm67 = vcmask 130048
    %v69 = vsel %vm67, %v39, 0
    %v72 = vsel %vm67, %v40, 0
    %v75 = vsel %vm67, %v41, 0
    %v78 = vsel %vm67, %v42, 0
    %80 = vmatprep.subr.mxu0 0.0
    %81 = vmatpush1.msra.mxu0 0.0
    %82 = vmatprep.subr.mxu0 0.0
    %83 = vmatpush1.msra.mxu0 0.0
    %84 = vmatprep.subr.mxu0 0.0
    %85 = vmatpush1.msra.mxu0 0.0
    %86 = vmatprep.subr.mxu0 0.0
    %87 = vmatpush1.msra.mxu0 0.0
    %88 = vmatprep.subr.mxu0 0.0
    %89 = vmatpush1.msra.mxu0 0.0
    %90 = vmatprep.subr.mxu0 0.0
    %91 = vmatpush1.msra.mxu0 0.0
    %92 = vmatprep.subr.mxu0 0.0
    %93 = vmatpush1.msra.mxu0 0.0
    %94 = vmatprep.subr.mxu0 0.0
    %95 = vmatpush1.msra.mxu0 0.0
    %96 = vmatprep.subr.mxu0 0.0
    %97 = vmatpush1.msra.mxu0 0.0
    %98 = vmatprep.subr.mxu0 0.0
    %99 = vmatpush1.msra.mxu0 0.0
    %100 = vmatprep.subr.mxu0 0.0
    %101 = vmatpush1.msra.mxu0 0.0
    %102 = vmatprep.subr.mxu0 0.0
    %103 = vmatpush1.msra.mxu0 0.0
    %104 = vmatprep.subr.mxu0 0.0
    %105 = vmatpush1.msra.mxu0 0.0
    %106 = vmatprep.subr.mxu0 0.0
    %107 = vmatpush1.msra.mxu0 0.0
    %108 = vmatprep.subr.mxu0 0.0
    %109 = vmatpush1.msra.mxu0 %v38
    %110 = vmatprep.subr.mxu0 0.0
    %111 = vmatpush1.msra.mxu0 %v37
    %112 = vmatprep.subr.mxu0 0.0
    %113 = vmatpush2.msra.mxu0 0.0
    %114 = vmatprep.subr.mxu0 0.0
    %115 = vmatpush2.msra.mxu0 0.0
    %116 = vmatprep.subr.mxu0 0.0
    %117 = vmatpush2.msra.mxu0 0.0
    %118 = vmatprep.subr.mxu0 0.0
    %119 = vmatpush2.msra.mxu0 0.0
    %120 = vmatprep.subr.mxu0 0.0
    %121 = vmatpush2.msra.mxu0 0.0
    %122 = vmatprep.subr.mxu0 0.0
    %123 = vmatpush2.msra.mxu0 0.0
    %124 = vmatprep.subr.mxu0 0.0
    %125 = vmatpush2.msra.mxu0 0.0
    %126 = vmatprep.subr.mxu0 0.0
    %127 = vmatpush2.msra.mxu0 0.0
    %128 = vmatprep.subr.mxu0 0.0
    %129 = vmatpush2.msra.mxu0 0.0
    %130 = vmatprep.subr.mxu0 0.0
    %131 = vmatpush2.msra.mxu0 0.0
    %132 = vmatprep.subr.mxu0 0.0
    %133 = vmatpush2.msra.mxu0 0.0
    %134 = vmatprep.subr.mxu0 0.0
    %135 = vmatpush2.msra.mxu0 0.0
    %136 = vmatprep.subr.mxu0 0.0
    %137 = vmatpush2.msra.mxu0 0.0
    %138 = vmatprep.subr.mxu0 0.0
    %139 = vmatpush2.msra.mxu0 0.0
    %140 = vmatprep.subr.mxu0 0.0
    %141 = vmatpush2.msra.mxu0 0.0
    %142 = vmatprep.subr.mxu0 0.0
    %143 = vmatpush2.msra.mxu0 0.0
    %144 = vmatprep.mubr.f32.mxu0 0.0
    %145 = vmatmul.mubr.f32.gmra.mxu0 %v69
    %v146 = vpop.f32.mrf.mxu0
    %v147 = vadd.f32 %v50, %v146
    %v148 = vpop.f32.mrf.mxu0
    %149 = vmatprep.mubr.f32.mxu0 0.0
    %150 = vmatmul.mubr.f32.gmra.mxu0 %v72
    %v151 = vpop.f32.mrf.mxu0
    %v152 = vadd.f32 %v55, %v151
    %v153 = vpop.f32.mrf.mxu0
    %154 = vmatprep.mubr.f32.mxu0 0.0
    %155 = vmatmul.mubr.f32.gmra.mxu0 %v75
    %v156 = vpop.f32.mrf.mxu0
    %v157 = vadd.f32 %v60, %v156
    %v158 = vpop.f32.mrf.mxu0
    %159 = vmatprep.mubr.f32.mxu0 0.0
    %160 = vmatmul.mubr.f32.gmra.mxu0 %v78
    %v161 = vpop.f32.mrf.mxu0
    %v162 = vadd.f32 %v65, %v161
    %v163 = vpop.f32.mrf.mxu0
    %164 = vdwg.mxu0
    %v165 = vtanh.pop %v147
    %v166 = vtanh.pop %v152
    %v167 = vtanh.pop %v157
    %v168 = vtanh.pop %v162
    %v169 = vld [vmem:[%s3] sm:$0xff]
    %v170 = vld [vmem:[%s3 + $0x8] sm:$0xff]
    %v171 = vld [vmem:[%s3 + $0x10] sm:$0xff]
    %v172 = vld [vmem:[%s3 + $0x18] sm:$0xff]
    %v173 = vld [vmem:[%s4] sm:$0xff]
    %v174 = vld [vmem:[%s4 + $0x8] sm:$0xff]
    %v175 = vld [vmem:[%s4 + $0x10] sm:$0xff]
    %v176 = vld [vmem:[%s4 + $0x18] sm:$0xff]
    %178 = vset.pattern.permute.xlu0 0
    %179 = vperm.xlu0 %178, %v173
    %v180 = vpop.permute.xlu0 %179
    %183 = vset.pattern.permute.xlu0 0
    %184 = vperm.xlu0 %183, %v174
    %v185 = vpop.permute.xlu0 %184
    %188 = vset.pattern.permute.xlu0 0
    %189 = vperm.xlu0 %188, %v175
    %v190 = vpop.permute.xlu0 %189
    %193 = vset.pattern.permute.xlu0 0
    %194 = vperm.xlu0 %193, %v176
    %v195 = vpop.permute.xlu0 %194
    %vm197 = vcmask 261120
    %v199 = vsel %vm197, %v169, 0
    %v202 = vsel %vm197, %v170, 0
    %v205 = vsel %vm197, %v171, 0
    %v208 = vsel %vm197, %v172, 0
    %210 = vmatprep.subr.mxu0 0.0
    %211 = vmatpush1.msra.mxu0 0.0
    %212 = vmatprep.subr.mxu0 0.0
    %213 = vmatpush1.msra.mxu0 0.0
    %214 = vmatprep.subr.mxu0 0.0
    %215 = vmatpush1.msra.mxu0 0.0
    %216 = vmatprep.subr.mxu0 0.0
    %217 = vmatpush1.msra.mxu0 0.0
    %218 = vmatprep.subr.mxu0 0.0
    %219 = vmatpush1.msra.mxu0 0.0
    %220 = vmatprep.subr.mxu0 0.0
    %221 = vmatpush1.msra.mxu0 0.0
    %222 = vmatprep.subr.mxu0 0.0
    %223 = vmatpush1.msra.mxu0 0.0
    %224 = vmatprep.subr.mxu0 0.0
    %225 = vmatpush1.msra.mxu0 0.0
    %226 = vmatprep.subr.mxu0 0.0
    %227 = vmatpush1.msra.mxu0 0.0
    %228 = vmatprep.subr.mxu0 0.0
    %229 = vmatpush1.msra.mxu0 0.0
    %230 = vmatprep.subr.mxu0 0.0
    %231 = vmatpush1.msra.mxu0 0.0
    %232 = vmatprep.subr.mxu0 0.0
    %233 = vmatpush1.msra.mxu0 0.0
    %234 = vmatprep.subr.mxu0 0.0
    %235 = vmatpush1.msra.mxu0 %v168
    %236 = vmatprep.subr.mxu0 0.0
    %237 = vmatpush1.msra.mxu0 %v167
    %238 = vmatprep.subr.mxu0 0.0
    %239 = vmatpush1.msra.mxu0 %v166
    %240 = vmatprep.subr.mxu0 0.0
    %241 = vmatpush1.msra.mxu0 %v165
    %242 = vmatprep.subr.mxu0 0.0
    %243 = vmatpush2.msra.mxu0 0.0
    %244 = vmatprep.subr.mxu0 0.0
    %245 = vmatpush2.msra.mxu0 0.0
    %246 = vmatprep.subr.mxu0 0.0
    %247 = vmatpush2.msra.mxu0 0.0
    %248 = vmatprep.subr.mxu0 0.0
    %249 = vmatpush2.msra.mxu0 0.0
    %250 = vmatprep.subr.mxu0 0.0
    %251 = vmatpush2.msra.mxu0 0.0
    %252 = vmatprep.subr.mxu0 0.0
    %253 = vmatpush2.msra.mxu0 0.0
    %254 = vmatprep.subr.mxu0 0.0
    %255 = vmatpush2.msra.mxu0 0.0
    %256 = vmatprep.subr.mxu0 0.0
    %257 = vmatpush2.msra.mxu0 0.0
    %258 = vmatprep.subr.mxu0 0.0
    %259 = vmatpush2.msra.mxu0 0.0
    %260 = vmatprep.subr.mxu0 0.0
    %261 = vmatpush2.msra.mxu0 0.0
    %262 = vmatprep.subr.mxu0 0.0
    %263 = vmatpush2.msra.mxu0 0.0
    %264 = vmatprep.subr.mxu0 0.0
    %265 = vmatpush2.msra.mxu0 0.0
    %266 = vmatprep.subr.mxu0 0.0
    %267 = vmatpush2.msra.mxu0 0.0
    %268 = vmatprep.subr.mxu0 0.0
    %269 = vmatpush2.msra.mxu0 0.0
    %270 = vmatprep.subr.mxu0 0.0
    %271 = vmatpush2.msra.mxu0 0.0
    %272 = vmatprep.subr.mxu0 0.0
    %273 = vmatpush2.msra.mxu0 0.0
    %274 = vmatprep.mubr.f32.mxu0 0.0
    %275 = vmatmul.mubr.f32.gmra.mxu0 %v199
    %v276 = vpop.f32.mrf.mxu0
    %v277 = vadd.f32 %v180, %v276
    %v278 = vpop.f32.mrf.mxu0
    %279 = vmatprep.mubr.f32.mxu0 0.0
    %280 = vmatmul.mubr.f32.gmra.mxu0 %v202
    %v281 = vpop.f32.mrf.mxu0
    %v282 = vadd.f32 %v185, %v281
    %v283 = vpop.f32.mrf.mxu0
    %284 = vmatprep.mubr.f32.mxu0 0.0
    %285 = vmatmul.mubr.f32.gmra.mxu0 %v205
    %v286 = vpop.f32.mrf.mxu0
    %v287 = vadd.f32 %v190, %v286
    %v288 = vpop.f32.mrf.mxu0
    %289 = vmatprep.mubr.f32.mxu0 0.0
    %290 = vmatmul.mubr.f32.gmra.mxu0 %v208
    %v291 = vpop.f32.mrf.mxu0
    %v292 = vadd.f32 %v195, %v291
    %v293 = vpop.f32.mrf.mxu0
    %294 = vdwg.mxu0
    %v295 = vtanh.pop %v277
    %v296 = vtanh.pop %v282
    %v297 = vtanh.pop %v287
    %v298 = vtanh.pop %v292
    %v299 = vld [vmem:[%s5] sm:$0xff]
    %v300 = vld [vmem:[%s6] sm:$0xff]
    %302 = vset.pattern.permute.xlu0 0
    %303 = vperm.xlu0 %302, %v300
    %v304 = vpop.permute.xlu0 %303
    %v307 = vsel %vm197, %v299, 0
    %309 = vmatprep.subr.mxu0 0.0
    %310 = vmatpush1.msra.mxu0 0.0
    %311 = vmatprep.subr.mxu0 0.0
    %312 = vmatpush1.msra.mxu0 0.0
    %313 = vmatprep.subr.mxu0 0.0
    %314 = vmatpush1.msra.mxu0 0.0
    %315 = vmatprep.subr.mxu0 0.0
    %316 = vmatpush1.msra.mxu0 0.0
    %317 = vmatprep.subr.mxu0 0.0
    %318 = vmatpush1.msra.mxu0 0.0
    %319 = vmatprep.subr.mxu0 0.0
    %320 = vmatpush1.msra.mxu0 0.0
    %321 = vmatprep.subr.mxu0 0.0
    %322 = vmatpush1.msra.mxu0 0.0
    %323 = vmatprep.subr.mxu0 0.0
    %324 = vmatpush1.msra.mxu0 0.0
    %325 = vmatprep.subr.mxu0 0.0
    %326 = vmatpush1.msra.mxu0 0.0
    %327 = vmatprep.subr.mxu0 0.0
    %328 = vmatpush1.msra.mxu0 0.0
    %329 = vmatprep.subr.mxu0 0.0
    %330 = vmatpush1.msra.mxu0 0.0
    %331 = vmatprep.subr.mxu0 0.0
    %332 = vmatpush1.msra.mxu0 0.0
    %333 = vmatprep.subr.mxu0 0.0
    %334 = vmatpush1.msra.mxu0 %v298
    %335 = vmatprep.subr.mxu0 0.0
    %336 = vmatpush1.msra.mxu0 %v297
    %337 = vmatprep.subr.mxu0 0.0
    %338 = vmatpush1.msra.mxu0 %v296
    %339 = vmatprep.subr.mxu0 0.0
    %340 = vmatpush1.msra.mxu0 %v295
    %341 = vmatprep.subr.mxu0 0.0
    %342 = vmatpush2.msra.mxu0 0.0
    %343 = vmatprep.subr.mxu0 0.0
    %344 = vmatpush2.msra.mxu0 0.0
    %345 = vmatprep.subr.mxu0 0.0
    %346 = vmatpush2.msra.mxu0 0.0
    %347 = vmatprep.subr.mxu0 0.0
    %348 = vmatpush2.msra.mxu0 0.0
    %349 = vmatprep.subr.mxu0 0.0
    %350 = vmatpush2.msra.mxu0 0.0
    %351 = vmatprep.subr.mxu0 0.0
    %352 = vmatpush2.msra.mxu0 0.0
    %353 = vmatprep.subr.mxu0 0.0
    %354 = vmatpush2.msra.mxu0 0.0
    %355 = vmatprep.subr.mxu0 0.0
    %356 = vmatpush2.msra.mxu0 0.0
    %357 = vmatprep.subr.mxu0 0.0
    %358 = vmatpush2.msra.mxu0 0.0
    %359 = vmatprep.subr.mxu0 0.0
    %360 = vmatpush2.msra.mxu0 0.0
    %361 = vmatprep.subr.mxu0 0.0
    %362 = vmatpush2.msra.mxu0 0.0
    %363 = vmatprep.subr.mxu0 0.0
    %364 = vmatpush2.msra.mxu0 0.0
    %365 = vmatprep.subr.mxu0 0.0
    %366 = vmatpush2.msra.mxu0 0.0
    %367 = vmatprep.subr.mxu0 0.0
    %368 = vmatpush2.msra.mxu0 0.0
    %369 = vmatprep.subr.mxu0 0.0
    %370 = vmatpush2.msra.mxu0 0.0
    %371 = vmatprep.subr.mxu0 0.0
    %372 = vmatpush2.msra.mxu0 0.0
    %373 = vmatprep.mubr.f32.mxu0 0.0
    %374 = vmatmul.mubr.f32.gmra.mxu0 %v307
    %v375 = vpop.f32.mrf.mxu0
    %v376 = vadd.f32 %v304, %v375
    %v377 = vpop.f32.mrf.mxu0
    %378 = vdwg.mxu0
    %vm379 = vcmask 64512
    %v380 = vsel %vm379, %v376, -inf
    %v381 = vrot.slane %v380, 4
    %v382 = vmax.f32 %v380, %v381
    %v383 = vrot.slane %v382, 2
    %v384 = vmax.f32 %v382, %v383
    %v385 = vrot.slane %v384, 1
    %v386 = vmax.f32 %v384, %v385
    %v387 = vsub.f32 %v376, %v386
    %v388 = vmul.f32 %v387, 1.442695
    %v389 = vpow.pop %v388
    %v390 = vsel %vm379, %v389, 0.0
    %v391 = vrot.slane %v390, 4
    %v392 = vadd.f32 %v390, %v391
    %v393 = vrot.slane %v392, 2
    %v394 = vadd.f32 %v392, %v393
    %v395 = vrot.slane %v394, 1
    %v396 = vadd.f32 %v394, %v395
    %v397 = vlog2.pop %v396
    %v398 = vmul.f32 %v397, 0.6931472
    %v399 = vsub.f32 %v387, %v398
    %v400 = vld [vmem:[%s8] sm:$0xff]
    %v401 = vadd.f32 %v387, %v400
    %v402 = vlaneseq
    %v403 = vshrl.u32 %v402, 7
    %v404 = vsel %vm379, %v401, -inf
    %v405 = vrot.slane %v404, 4
    %v406 = vmax.f32 %v404, %v405
    %v407 = vrot.slane %v406, 2
    %v408 = vmax.f32 %v406, %v407
    %v409 = vrot.slane %v408, 1
    %v410 = vmax.f32 %v408, %v409
    %vm411 = vcmp.ge.f32.partialorder %v401, %v410
    %v412 = vsel %vm411, %v403, 1073741824
    %v413 = vsel %vm379, %v412, 2147483647
    %v414 = vrot.slane %v413, 4
    %vm415 = vcmp.lt.s32.totalorder %v413, %v414
    %v416 = vsel %vm415, %v413, %v414
    %v417 = vrot.slane %v416, 2
    %vm418 = vcmp.lt.s32.totalorder %v416, %v417
    %v419 = vsel %vm418, %v416, %v417
    %v420 = vrot.slane %v419, 1
    %vm421 = vcmp.lt.s32.totalorder %v419, %v420
    %v422 = vsel %vm421, %v419, %v420
    %vm423 = vcmask 57344
    %424 = vst.msk [vmem:[#allocation2] sm:$0x1] %vm423, %v422
    %vm425 = vcmp.eq.s32.totalorder %v403, %v422
    %v426 = vsel %vm425, 1, 0
    %v427 = vcvt.s32.f32 %v426
    %v428 = vmul.f32 %v399, %v427
    %v429 = vsel %vm379, %v428, 0.0
    %v430 = vrot.slane %v429, 4
    %v431 = vadd.f32 %v429, %v430
    %v432 = vrot.slane %v431, 2
    %v433 = vadd.f32 %v431, %v432
    %v434 = vrot.slane %v433, 1
    %v435 = vadd.f32 %v433, %v434
    %436 = vst.msk [vmem:[#allocation6] sm:$0x1] %vm423, %v435
    %v437 = vld [vmem:[%s7] sm:$0x1]
    %v438 = vlaneseq
    %v439 = vshrl.u32 %v438, 7
    %v440 = vsub.s32 0, %v439
    %v441 = vrot.slane %v437, %v440
    %vm442 = vcmp.eq.s32.totalorder %v403, %v441
    %v443 = vsel %vm442, 1, 0
    %v444 = vcvt.s32.f32 %v443
    %v445 = vmul.f32 %v399, %v444
    %v446 = vsel %vm379, %v445, 0.0
    %v447 = vrot.slane %v446, 4
    %v448 = vadd.f32 %v446, %v447
    %v449 = vrot.slane %v448, 2
    %v450 = vadd.f32 %v448, %v449
    %v451 = vrot.slane %v450, 1
    %v452 = vadd.f32 %v450, %v451
    %453 = vst.msk [vmem:[#allocation4] sm:$0x1] %vm423, %v452
    // Predicated region
    $region38: #{tpu_custom_call.1} parent=1 // pred_check
      _
    $region39: #{tpu_custom_call.1} parent=1 // pred_check_branch
      %455 = sbr.rel (0) target = $region41
    $region40: #{tpu_custom_call.1} parent=1 // pred_region
      %s457 = ssub.s32 16, 16
      %458 = vsyncadd [#allocation3], %s457
      %s460 = sshll.u32 [#allocation2], 4
      %s461 = int_to_ptr.vmem [resolvable:$true] %s460
      %463 = dma.vmem_to_hbm [thread:$0]  %s461, 16, %s9, [#allocation3]
    $region41: #{tpu_custom_call.1} parent=1 // pred_fallthru
      _
    // Predicated region
    $region42: #{tpu_custom_call.1} parent=1 // pred_check
      _
    $region43: #{tpu_custom_call.1} parent=1 // pred_check_branch
      %465 = sbr.rel (0) target = $region45
    $region44: #{tpu_custom_call.1} parent=1 // pred_region
      %s467 = ssub.s32 16, 16
      %468 = vsyncadd [#allocation5], %s467
      %s470 = sshll.u32 [#allocation4], 4
      %s471 = int_to_ptr.vmem [resolvable:$true] %s470
      %473 = dma.vmem_to_hbm [thread:$0]  %s471, 16, %s10, [#allocation5]
    $region45: #{tpu_custom_call.1} parent=1 // pred_fallthru
      _
    // Predicated region
    $region46: #{tpu_custom_call.1} parent=1 // pred_check
      _
    $region47: #{tpu_custom_call.1} parent=1 // pred_check_branch
      %475 = sbr.rel (0) target = $region49
    $region48: #{tpu_custom_call.1} parent=1 // pred_region
      %s477 = ssub.s32 16, 16
      %478 = vsyncadd [#allocation5], %s477
      %s480 = sshll.u32 [#allocation6], 4
      %s481 = int_to_ptr.vmem [resolvable:$true] %s480
      %483 = dma.vmem_to_hbm [thread:$0]  %s481, 16, %s11, [#allocation5]
    $region49: #{tpu_custom_call.1} parent=1 // pred_fallthru
      _
    // Predicated region
    $region50: #{tpu_custom_call.1} parent=1 // pred_check
      _
    $region51: #{tpu_custom_call.1} parent=1 // pred_check_branch
      %485 = sbr.rel (0) target = $region53
    $region52: #{tpu_custom_call.1} parent=1 // pred_region
      %486 = dma.done [#allocation3], 16
    $region53: #{tpu_custom_call.1} parent=1 // pred_fallthru
      _
    // Predicated region
    $region54: #{tpu_custom_call.1} parent=1 // pred_check
      _
    $region55: #{tpu_custom_call.1} parent=1 // pred_check_branch
      %488 = sbr.rel (0) target = $region57
    $region56: #{tpu_custom_call.1} parent=1 // pred_region
      %489 = dma.done [#allocation5], 16
    $region57: #{tpu_custom_call.1} parent=1 // pred_fallthru
      _
    // Predicated region
    $region58: #{tpu_custom_call.1} parent=1 // pred_check
      _
    $region59: #{tpu_custom_call.1} parent=1 // pred_check_branch
      %491 = sbr.rel (0) target = $region61
    $region60: #{tpu_custom_call.1} parent=1 // pred_region
      %492 = dma.done [#allocation5], 16
    $region61: #{tpu_custom_call.1} parent=1 // pred_fallthru
      _
    %493 = vsyncpa [#allocation3], 1
    %494 = vsyncpa [#allocation5], 1

</llo_original>
